<compile_context>
chip_gen: v5e
topology: v5e:2x2
jax: 0.10.0
libtpu: 0.0.40
codegen_flags: <defaults>
</compile_context>

<pallas_src>
import functools

import jax
import jax.numpy as jnp
import numpy as np
from jax.experimental import pallas as pl
from jax.experimental.pallas import tpu as pltpu


def _decoder_kernel(x_ref, w3_ref, bl_ref, al_ref, wf_ref, o_ref, hp_ref,
                    *, t_total, tile_t, halo):
    # x_ref : (G, 1, W, C)   haloed input window, W = tile_t + 2*halo, compute dtype
    # w3_ref: (L1, 3, C, C)  per-layer taps: k=0 -> h[q+1], k=1 -> h[q], k=2 -> h[q-1]
    # bl_ref: (L1, 1, C)     per-layer ConvTranspose1d bias (f32)
    # al_ref: (L1,) SMEM     per-layer PReLU alpha
    # wf_ref: (C, 2F)        fused final deconv weights [W[:,:,:stride] | W[:,:,stride:]]
    # o_ref : (G, tile_t, 2F) raw per-frame (A|B) contributions, f32, lane-dense
    # hp_ref: (G, W+2, C)    zero-bordered scratch providing the +-1 frame shifts
    G = x_ref.shape[0]
    W = x_ref.shape[2]
    C = x_ref.shape[3]
    L1 = w3_ref.shape[0]
    M = G * W
    cdt = hp_ref.dtype

    # Structural zero padding of ConvTranspose1d(k=3, p=1): only the two border rows
    # are ever read as zeros; interior rows are fully rewritten each layer.
    zrow = jnp.zeros((G, 1, C), cdt)
    hp_ref[:, pl.ds(0, 1), :] = zrow
    hp_ref[:, pl.ds(W + 1, 1), :] = zrow

    # Frames outside the true sequence [0, t_total) (left/right halo of edge tiles and
    # the tail padding of the last tile) must act as zero padding at *every* layer.
    j = pl.program_id(1)
    frame = (j * tile_t - halo) + jax.lax.broadcasted_iota(jnp.int32, (1, W, 1), 1)
    mask = jnp.logical_and(frame >= 0, frame < t_total).astype(jnp.float32)  # (1, W, 1)

    h = x_ref[...].reshape(G, W, C)                       # compute dtype
    for l in range(L1):
        hp_ref[:, pl.ds(1, W), :] = h
        h_nxt = hp_ref[:, pl.ds(2, W), :].reshape(M, C)   # frame q+1 (zero past window)
        h_prv = hp_ref[:, pl.ds(0, W), :].reshape(M, C)   # frame q-1 (zero before window)
        # Three accumulating matmuls (same MAC count as one K=3C matmul, no concat).
        y = jnp.dot(h_nxt, w3_ref[l, 0], preferred_element_type=jnp.float32)
        y = y + jnp.dot(h.reshape(M, C), w3_ref[l, 1], preferred_element_type=jnp.float32)
        y = y + jnp.dot(h_prv, w3_ref[l, 2], preferred_element_type=jnp.float32)
        y = y + bl_ref[l]                                 # (1, C) bias, f32
        a = al_ref[l]                                     # PReLU alpha (SMEM scalar)
        y = jnp.where(y > 0.0, y, a * y).reshape(G, W, C)
        h = (y * mask).astype(cdt)                        # keep out-of-sequence frames at 0

    # Final ConvTranspose1d (K = 2*stride): both kernel halves in one matmul, N = 2F.
    # Only the tile's center frames are needed; halo frames are discarded here.
    hc = h[:, halo:halo + tile_t, :].reshape(G * tile_t, C)
    ab = jnp.dot(hc, wf_ref[...], preferred_element_type=jnp.float32)  # (G*Tt, 2F)
    o_ref[...] = ab.reshape(G, tile_t, o_ref.shape[2])    # single dense store


def decoder_pallas(x, params, filters_len, *, matmul_dtype=jnp.float32,
                   batch_group=None, time_tile=2048, vmem_limit_bytes=None):
    """x: (B, C, t) float32 -> (B, out_c, T) with T = (t - 1) * stride + filters_len."""
    w_layers, b_layers, alphas, w_final, b_final = params
    stride = filters_len // 2
    B, C, t = x.shape
    out_c = w_final.shape[1]
    F = out_c * stride
    L1 = w_layers.shape[0]
    assert L1 >= 1, "layer_num must be >= 2 (at least one k=3 ConvTranspose1d layer)"
    halo = L1                                  # each k=3, p=1 layer needs 1 frame of context

    # --- tiling choices -----------------------------------------------------------
    def _round_up(a, m):
        return (a + m - 1) // m * m

    tile_t = min(_round_up(int(time_tile), 8), _round_up(t, 8))   # sublane-aligned tile
    num_tiles = -(-t // tile_t)
    t_pad = num_tiles * tile_t
    W = tile_t + 2 * halo
    if batch_group is None:
        # v5e/v6e: keep G=B (maximize matmul M) once the time axis already provides
        # several grid steps; otherwise split the batch so the "parallel" grid has
        # >=2 steps (pipelining and v7x megacore).
        if num_tiles > 1 or B == 1:
            batch_group = B
        else:
            batch_group = B // 2 if B % 2 == 0 else 1
    G = batch_group
    assert B % G == 0, "batch_group must divide the batch size"

    # --- parameter / layout glue (plain JAX) ---------------------------------------
    x_tc = jnp.transpose(x, (0, 2, 1))                             # (B, t, C)
    x_p = jnp.pad(x_tc, ((0, 0), (halo, t_pad - t + halo), (0, 0)))
    win_idx = jnp.arange(num_tiles)[:, None] * tile_t + jnp.arange(W)[None, :]
    x_win = x_p[:, win_idx, :].astype(matmul_dtype)                # (B, num_tiles, W, C)

    # Per-layer taps kept as three (C, C) blocks: tap k multiplies h[q + 1 - k].
    w3 = jnp.transpose(w_layers, (0, 3, 1, 2)).astype(matmul_dtype)  # (L1, 3, C, C)
    bl = b_layers[:, None, :].astype(jnp.float32)                  # (L1, 1, C)

    # Both halves of the final deconv kernel fused into one (C, 2F) matrix.
    wa = w_final[:, :, :stride].reshape(C, F)
    wb = w_final[:, :, stride:].reshape(C, F)
    wf = jnp.concatenate([wa, wb], axis=1).astype(matmul_dtype)    # (C, 2F)

    # --- VMEM budget / scheduler hints ---------------------------------------------
    c_item = np.dtype(matmul_dtype).itemsize
    block_bytes = (2 * G * W * C * c_item                          # input window (dbl-buffered)
                   + 2 * G * tile_t * 2 * F * 4                    # output block (dbl-buffered)
                   + 2 * (w3.size * c_item + bl.size * 4 + wf.size * c_item)
                   + G * (W + 2) * C * c_item)                     # hp scratch
    if vmem_limit_bytes is None:
        # TODO(synk): on v6e this limit can be raised toward ~100 MiB for larger tiles.
        vmem_limit_bytes = int(min(max(2 * block_bytes, 16 << 20), 64 << 20))
    flops = 2 * B * t_pad * C * (3 * C * L1 + 2 * F)
    bytes_accessed = int(x_win.size * c_item + w3.size * c_item + bl.size * 4
                         + wf.size * c_item + alphas.size * 4 + B * t_pad * 2 * F * 4)

    kernel = functools.partial(_decoder_kernel, t_total=t, tile_t=tile_t, halo=halo)

    # TODO(synk): on v7x, single-buffer the constant operands (pipeline_mode=pl.Buffered(1)
    # on w3/bl/wf) to reclaim VMEM for larger time tiles.
    out_raw = pl.pallas_call(
        kernel,
        out_shape=jax.ShapeDtypeStruct((B, t_pad, 2 * F), jnp.float32),
        grid=(B // G, num_tiles),
        in_specs=[
            pl.BlockSpec((G, 1, W, C), lambda i, j: (i, j, 0, 0)),       # haloed input window
            pl.BlockSpec((L1, 3, C, C), lambda i, j: (0, 0, 0, 0)),      # layer taps
            pl.BlockSpec((L1, 1, C), lambda i, j: (0, 0, 0)),            # layer biases
            pl.BlockSpec(memory_space=pltpu.MemorySpace.SMEM),           # PReLU alphas
            pl.BlockSpec((C, 2 * F), lambda i, j: (0, 0)),               # fused final weights
        ],
        out_specs=pl.BlockSpec((G, tile_t, 2 * F), lambda i, j: (i, j, 0)),
        scratch_shapes=[pltpu.VMEM((G, W + 2, C), matmul_dtype)],
        compiler_params=pltpu.CompilerParams(
            dimension_semantics=("parallel", "parallel"),
            vmem_limit_bytes=vmem_limit_bytes),
        cost_estimate=pl.CostEstimate(flops=flops, transcendentals=0,
                                      bytes_accessed=bytes_accessed),
    )(x_win, w3, bl, alphas, wf)

    # --- epilogue (plain JAX): A/B split, +-1-frame shift, bias, overlap-add --------
    out_raw = out_raw[:, :t, :]                                    # drop tail-padding frames
    A = out_raw[:, :, :F]                                          # frame q -> output block q
    Bm = out_raw[:, :, F:]                                         # frame q -> output block q+1
    zrow = jnp.zeros((B, 1, F), jnp.float32)
    bias_flat = jnp.repeat(b_final, stride)                        # (F,)
    blocks = (jnp.concatenate([A, zrow], axis=1)
              + jnp.concatenate([zrow, Bm], axis=1)
              + bias_flat[None, None, :])                          # (B, t+1, F)
    T = (t + 1) * stride                                           # == (t-1)*stride + filters_len
    return (blocks.reshape(B, t + 1, out_c, stride)
            .transpose(0, 2, 1, 3)
            .reshape(B, out_c, T))


def decoder_ref(x, params, filters_len):
    """Pure-JAX reference following the PyTorch op definitions."""
    w_layers, b_layers, alphas, w_final, b_final = params
    stride = filters_len // 2
    h = x
    L1 = w_layers.shape[0]
    for l in range(L1):
        w = w_layers[l]                                            # (C, C, 3)
        hp = jnp.pad(h, ((0, 0), (0, 0), (1, 1)))
        y = (jnp.einsum('bit,io->bot', hp[:, :, 2:], w[:, :, 0])
             + jnp.einsum('bit,io->bot', hp[:, :, 1:-1], w[:, :, 1])
             + jnp.einsum('bit,io->bot', hp[:, :, :-2], w[:, :, 2]))
        y = y + b_layers[l][None, :, None]
        h = jnp.where(y > 0, y, alphas[l] * y)
    B, C, t = h.shape
    _, out_c, K = w_final.shape
    T = (t - 1) * stride + K
    out = jnp.zeros((B, out_c, T), jnp.float32)
    contrib = jnp.einsum('bis,iok->bosk', h, w_final)              # (B, out_c, t, K)
    for s in range(t):
        out = out.at[:, :, s * stride:s * stride + K].add(contrib[:, :, s, :])
    return out + b_final[None, :, None]


def make_decoder_params(key, in_c, out_c, filters_len, layer_num):
    L1 = layer_num - 1
    k0, k1, k2, k3 = jax.random.split(key, 4)
    w_layers = 0.1 * jax.random.normal(k0, (L1, in_c, in_c, 3), jnp.float32)
    b_layers = 0.05 * jax.random.normal(k1, (L1, in_c), jnp.float32)
    alphas = jnp.full((L1,), 0.25, jnp.float32)                    # PReLU default init
    w_final = 0.1 * jax.random.normal(k2, (in_c, out_c, filters_len), jnp.float32)
    b_final = 0.05 * jax.random.normal(k3, (out_c,), jnp.float32)
    return (w_layers, b_layers, alphas, w_final, b_final)


if __name__ == "__main__":
    # small shapes consistent with forward: x [Batch, filters_num (in_c), t]
    B, in_c, out_c, t = 2, 32, 4, 8
    filters_len, layer_num = 16, 3

    key = jax.random.PRNGKey(0)
    kx, kx2, kp = jax.random.split(key, 3)
    x = jax.random.normal(kx, (B, in_c, t), jnp.float32)
    params = make_decoder_params(kp, in_c, out_c, filters_len, layer_num)

    ref = jax.block_until_ready(decoder_ref(x, params, filters_len))

    # f32 matmul path, single time tile (strict check).
    out_f32 = jax.block_until_ready(decoder_pallas(x, params, filters_len))
    assert out_f32.shape == (B, out_c, (t - 1) * (filters_len // 2) + filters_len)
    np.testing.assert_allclose(np.asarray(out_f32), np.asarray(ref), rtol=1e-4, atol=1e-4)

    # Time-tiled path: multiple tiles with L1-frame halos and tail padding.
    t2 = 40
    x2 = jax.random.normal(kx2, (B, in_c, t2), jnp.float32)
    ref2 = jax.block_until_ready(decoder_ref(x2, params, filters_len))
    out_tiled = jax.block_until_ready(
        decoder_pallas(x2, params, filters_len, time_tile=16))
    np.testing.assert_allclose(np.asarray(out_tiled), np.asarray(ref2), rtol=1e-4, atol=1e-4)

    # bf16 MXU-operand path (v6e/v7x); accumulation / bias / PReLU stay f32.
    out_bf16 = jax.block_until_ready(
        decoder_pallas(x, params, filters_len, matmul_dtype=jnp.bfloat16))
    np.testing.assert_allclose(np.asarray(out_bf16), np.asarray(ref), rtol=5e-2, atol=5e-2)

    print("KERNEL_OK")
</pallas_src>

<mosaic_0001>
module attributes {stable_mosaic.version = 11 : i64} {
  func.func @_decoder_kernel(%arg0: i32, %arg1: i32, %arg2: memref<1x1x12x32xf32, #tpu.memory_space<vmem>>, %arg3: memref<2x3x32x32xf32, #tpu.memory_space<vmem>>, %arg4: memref<2x1x32xf32, #tpu.memory_space<vmem>>, %arg5: memref<2xf32, #tpu.memory_space<smem>>, %arg6: memref<32x64xf32, #tpu.memory_space<vmem>>, %arg7: memref<1x8x64xf32, #tpu.memory_space<vmem>>, %arg8: memref<1x14x32xf32, #tpu.memory_space<vmem>>) attributes {dimension_semantics = [#tpu.dimension_semantics<parallel>, #tpu.dimension_semantics<parallel>], iteration_bounds = array<i64: 2, 1>, scalar_prefetch = 0 : i64, scratch_operands = 1 : i64, tpu.core_type = #tpu.core_type<tc>, window_params = [{transform_indices = @transform_0, window_bounds = array<i64: 1, 1, 12, 32>}, {pipeline_mode = #tpu.pipeline_mode<synchronous>, transform_indices = @transform_1, window_bounds = array<i64: 2, 3, 32, 32>}, {pipeline_mode = #tpu.pipeline_mode<synchronous>, transform_indices = @transform_2, window_bounds = array<i64: 2, 1, 32>}, {transform_indices = @transform_3, window_bounds = array<i64: 2>}, {pipeline_mode = #tpu.pipeline_mode<synchronous>, transform_indices = @transform_4, window_bounds = array<i64: 32, 64>}, {transform_indices = @transform_5, window_bounds = array<i64: 1, 8, 64>}]} {
    %cst = arith.constant 0.000000e+00 : f32
    %0 = vector.broadcast %cst : f32 to vector<1x1x32xf32>
    %c0 = arith.constant 0 : index
    %c0_0 = arith.constant 0 : index
    %c0_1 = arith.constant 0 : index
    %1 = vector.load %arg8[%c0, %c0_0, %c0_1] : memref<1x14x32xf32, #tpu.memory_space<vmem>>, vector<1x1x32xf32>
    tpu.vector_store %arg8[%c0, %c0_0, %c0_1], %0 {strides = array<i32>} : memref<1x14x32xf32, #tpu.memory_space<vmem>>, vector<1x1x32xf32>,
    %c0_2 = arith.constant 0 : index
    %c13 = arith.constant 13 : index
    %c0_3 = arith.constant 0 : index
    %2 = vector.load %arg8[%c0_2, %c13, %c0_3] : memref<1x14x32xf32, #tpu.memory_space<vmem>>, vector<1x1x32xf32>
    tpu.vector_store %arg8[%c0_2, %c13, %c0_3], %0 {strides = array<i32>} : memref<1x14x32xf32, #tpu.memory_space<vmem>>, vector<1x1x32xf32>,
    %c8_i32 = arith.constant 8 : i32
    %3 = arith.muli %arg1, %c8_i32 : i32
    %c2_i32 = arith.constant 2 : i32
    %4 = arith.subi %3, %c2_i32 : i32
    %5 = tpu.iota {dimensions = array<i32: 1>} : vector<1x12x1xi32>
    %6 = vector.broadcast %4 : i32 to vector<1x12x1xi32>
    %7 = arith.addi %6, %5 : vector<1x12x1xi32>
    %c0_i32 = arith.constant 0 : i32
    %8 = vector.broadcast %c0_i32 : i32 to vector<1x12x1xi32>
    %9 = arith.cmpi sge, %7, %8 : vector<1x12x1xi32>
    %c8_i32_4 = arith.constant 8 : i32
    %10 = vector.broadcast %c8_i32_4 : i32 to vector<1x12x1xi32>
    %11 = arith.cmpi slt, %7, %10 : vector<1x12x1xi32>
    %12 = arith.andi %9, %11 : vector<1x12x1xi1>
    %13 = arith.extui %12 : vector<1x12x1xi1> to vector<1x12x1xi32>
    %14 = arith.sitofp %13 : vector<1x12x1xi32> to vector<1x12x1xf32>
    %c0_5 = arith.constant 0 : index
    %c0_6 = arith.constant 0 : index
    %c0_7 = arith.constant 0 : index
    %c0_8 = arith.constant 0 : index
    %15 = vector.load %arg2[%c0_5, %c0_6, %c0_7, %c0_8] : memref<1x1x12x32xf32, #tpu.memory_space<vmem>>, vector<1x1x12x32xf32>
    %16 = vector.shape_cast %15 : vector<1x1x12x32xf32> to vector<1x12x32xf32>
    %c0_9 = arith.constant 0 : index
    %c1 = arith.constant 1 : index
    %c0_10 = arith.constant 0 : index
    %17 = vector.load %arg8[%c0_9, %c1, %c0_10] : memref<1x14x32xf32, #tpu.memory_space<vmem>>, vector<1x12x32xf32>
    tpu.vector_store %arg8[%c0_9, %c1, %c0_10], %16 {strides = array<i32>} : memref<1x14x32xf32, #tpu.memory_space<vmem>>, vector<1x12x32xf32>,
    %c0_11 = arith.constant 0 : index
    %c2 = arith.constant 2 : index
    %c0_12 = arith.constant 0 : index
    %18 = vector.load %arg8[%c0_11, %c2, %c0_12] : memref<1x14x32xf32, #tpu.memory_space<vmem>>, vector<1x12x32xf32>
    %19 = vector.shape_cast %18 : vector<1x12x32xf32> to vector<12x32xf32>
    %c0_13 = arith.constant 0 : index
    %c0_14 = arith.constant 0 : index
    %c0_15 = arith.constant 0 : index
    %20 = vector.load %arg8[%c0_13, %c0_14, %c0_15] : memref<1x14x32xf32, #tpu.memory_space<vmem>>, vector<1x12x32xf32>
    %21 = vector.shape_cast %20 : vector<1x12x32xf32> to vector<12x32xf32>
    %c0_16 = arith.constant 0 : index
    %c0_17 = arith.constant 0 : index
    %c0_18 = arith.constant 0 : index
    %c0_19 = arith.constant 0 : index
    %22 = vector.load %arg3[%c0_16, %c0_17, %c0_18, %c0_19] : memref<2x3x32x32xf32, #tpu.memory_space<vmem>>, vector<1x1x32x32xf32>
    %23 = vector.shape_cast %22 : vector<1x1x32x32xf32> to vector<32x32xf32>
    %cst_20 = arith.constant dense<0.000000e+00> : vector<12x32xf32>
    %24 = tpu.matmul %19, %23, %cst_20 {dimension_numbers = #tpu.dot_dimension_numbers<[1], [0], [0], [1], [0, 0, 1, 1], [], []>} : vector<12x32xf32>, vector<32x32xf32>, vector<12x32xf32> -> vector<12x32xf32>
    %25 = vector.shape_cast %16 : vector<1x12x32xf32> to vector<12x32xf32>
    %c0_21 = arith.constant 0 : index
    %c1_22 = arith.constant 1 : index
    %c0_23 = arith.constant 0 : index
    %c0_24 = arith.constant 0 : index
    %26 = vector.load %arg3[%c0_21, %c1_22, %c0_23, %c0_24] : memref<2x3x32x32xf32, #tpu.memory_space<vmem>>, vector<1x1x32x32xf32>
    %27 = vector.shape_cast %26 : vector<1x1x32x32xf32> to vector<32x32xf32>
    %cst_25 = arith.constant dense<0.000000e+00> : vector<12x32xf32>
    %28 = tpu.matmul %25, %27, %cst_25 {dimension_numbers = #tpu.dot_dimension_numbers<[1], [0], [0], [1], [0, 0, 1, 1], [], []>} : vector<12x32xf32>, vector<32x32xf32>, vector<12x32xf32> -> vector<12x32xf32>
    %29 = arith.addf %24, %28 : vector<12x32xf32>
    %c0_26 = arith.constant 0 : index
    %c2_27 = arith.constant 2 : index
    %c0_28 = arith.constant 0 : index
    %c0_29 = arith.constant 0 : index
    %30 = vector.load %arg3[%c0_26, %c2_27, %c0_28, %c0_29] : memref<2x3x32x32xf32, #tpu.memory_space<vmem>>, vector<1x1x32x32xf32>
    %31 = vector.shape_cast %30 : vector<1x1x32x32xf32> to vector<32x32xf32>
    %cst_30 = arith.constant dense<0.000000e+00> : vector<12x32xf32>
    %32 = tpu.matmul %21, %31, %cst_30 {dimension_numbers = #tpu.dot_dimension_numbers<[1], [0], [0], [1], [0, 0, 1, 1], [], []>} : vector<12x32xf32>, vector<32x32xf32>, vector<12x32xf32> -> vector<12x32xf32>
    %33 = arith.addf %29, %32 : vector<12x32xf32>
    %c0_31 = arith.constant 0 : index
    %c0_32 = arith.constant 0 : index
    %c0_33 = arith.constant 0 : index
    %34 = vector.load %arg4[%c0_31, %c0_32, %c0_33] : memref<2x1x32xf32, #tpu.memory_space<vmem>>, vector<1x1x32xf32>
    %35 = vector.shape_cast %34 : vector<1x1x32xf32> to vector<1x32xf32>
    %36 = vector.broadcast %35 : vector<1x32xf32> to vector<12x32xf32>
    %37 = arith.addf %33, %36 : vector<12x32xf32>
    %c0_34 = arith.constant 0 : index
    %38 = memref.load %arg5[%c0_34] : memref<2xf32, #tpu.memory_space<smem>>
    %cst_35 = arith.constant 0.000000e+00 : f32
    %39 = vector.broadcast %cst_35 : f32 to vector<12x32xf32>
    %40 = arith.cmpf ogt, %37, %39 : vector<12x32xf32>
    %41 = vector.broadcast %38 : f32 to vector<12x32xf32>
    %42 = arith.mulf %41, %37 : vector<12x32xf32>
    %43 = arith.select %40, %37, %42 : vector<12x32xi1>, vector<12x32xf32>
    %44 = vector.shape_cast %43 : vector<12x32xf32> to vector<1x12x32xf32>
    %45 = vector.broadcast %14 : vector<1x12x1xf32> to vector<1x12x32xf32>
    %46 = arith.mulf %44, %45 : vector<1x12x32xf32>
    %c0_36 = arith.constant 0 : index
    %c1_37 = arith.constant 1 : index
    %c0_38 = arith.constant 0 : index
    %47 = vector.load %arg8[%c0_36, %c1_37, %c0_38] : memref<1x14x32xf32, #tpu.memory_space<vmem>>, vector<1x12x32xf32>
    tpu.vector_store %arg8[%c0_36, %c1_37, %c0_38], %46 {strides = array<i32>} : memref<1x14x32xf32, #tpu.memory_space<vmem>>, vector<1x12x32xf32>,
    %c0_39 = arith.constant 0 : index
    %c2_40 = arith.constant 2 : index
    %c0_41 = arith.constant 0 : index
    %48 = vector.load %arg8[%c0_39, %c2_40, %c0_41] : memref<1x14x32xf32, #tpu.memory_space<vmem>>, vector<1x12x32xf32>
    %49 = vector.shape_cast %48 : vector<1x12x32xf32> to vector<12x32xf32>
    %c0_42 = arith.constant 0 : index
    %c0_43 = arith.constant 0 : index
    %c0_44 = arith.constant 0 : index
    %50 = vector.load %arg8[%c0_42, %c0_43, %c0_44] : memref<1x14x32xf32, #tpu.memory_space<vmem>>, vector<1x12x32xf32>
    %51 = vector.shape_cast %50 : vector<1x12x32xf32> to vector<12x32xf32>
    %c1_45 = arith.constant 1 : index
    %c0_46 = arith.constant 0 : index
    %c0_47 = arith.constant 0 : index
    %c0_48 = arith.constant 0 : index
    %52 = vector.load %arg3[%c1_45, %c0_46, %c0_47, %c0_48] : memref<2x3x32x32xf32, #tpu.memory_space<vmem>>, vector<1x1x32x32xf32>
    %53 = vector.shape_cast %52 : vector<1x1x32x32xf32> to vector<32x32xf32>
    %cst_49 = arith.constant dense<0.000000e+00> : vector<12x32xf32>
    %54 = tpu.matmul %49, %53, %cst_49 {dimension_numbers = #tpu.dot_dimension_numbers<[1], [0], [0], [1], [0, 0, 1, 1], [], []>} : vector<12x32xf32>, vector<32x32xf32>, vector<12x32xf32> -> vector<12x32xf32>
    %55 = vector.shape_cast %46 : vector<1x12x32xf32> to vector<12x32xf32>
    %c1_50 = arith.constant 1 : index
    %c1_51 = arith.constant 1 : index
    %c0_52 = arith.constant 0 : index
    %c0_53 = arith.constant 0 : index
    %56 = vector.load %arg3[%c1_50, %c1_51, %c0_52, %c0_53] : memref<2x3x32x32xf32, #tpu.memory_space<vmem>>, vector<1x1x32x32xf32>
    %57 = vector.shape_cast %56 : vector<1x1x32x32xf32> to vector<32x32xf32>
    %cst_54 = arith.constant dense<0.000000e+00> : vector<12x32xf32>
    %58 = tpu.matmul %55, %57, %cst_54 {dimension_numbers = #tpu.dot_dimension_numbers<[1], [0], [0], [1], [0, 0, 1, 1], [], []>} : vector<12x32xf32>, vector<32x32xf32>, vector<12x32xf32> -> vector<12x32xf32>
    %59 = arith.addf %54, %58 : vector<12x32xf32>
    %c1_55 = arith.constant 1 : index
    %c2_56 = arith.constant 2 : index
    %c0_57 = arith.constant 0 : index
    %c0_58 = arith.constant 0 : index
    %60 = vector.load %arg3[%c1_55, %c2_56, %c0_57, %c0_58] : memref<2x3x32x32xf32, #tpu.memory_space<vmem>>, vector<1x1x32x32xf32>
    %61 = vector.shape_cast %60 : vector<1x1x32x32xf32> to vector<32x32xf32>
    %cst_59 = arith.constant dense<0.000000e+00> : vector<12x32xf32>
    %62 = tpu.matmul %51, %61, %cst_59 {dimension_numbers = #tpu.dot_dimension_numbers<[1], [0], [0], [1], [0, 0, 1, 1], [], []>} : vector<12x32xf32>, vector<32x32xf32>, vector<12x32xf32> -> vector<12x32xf32>
    %63 = arith.addf %59, %62 : vector<12x32xf32>
    %c1_60 = arith.constant 1 : index
    %c0_61 = arith.constant 0 : index
    %c0_62 = arith.constant 0 : index
    %64 = vector.load %arg4[%c1_60, %c0_61, %c0_62] : memref<2x1x32xf32, #tpu.memory_space<vmem>>, vector<1x1x32xf32>
    %65 = vector.shape_cast %64 : vector<1x1x32xf32> to vector<1x32xf32>
    %66 = vector.broadcast %65 : vector<1x32xf32> to vector<12x32xf32>
    %67 = arith.addf %63, %66 : vector<12x32xf32>
    %c1_63 = arith.constant 1 : index
    %68 = memref.load %arg5[%c1_63] : memref<2xf32, #tpu.memory_space<smem>>
    %cst_64 = arith.constant 0.000000e+00 : f32
    %69 = vector.broadcast %cst_64 : f32 to vector<12x32xf32>
    %70 = arith.cmpf ogt, %67, %69 : vector<12x32xf32>
    %71 = vector.broadcast %68 : f32 to vector<12x32xf32>
    %72 = arith.mulf %71, %67 : vector<12x32xf32>
    %73 = arith.select %70, %67, %72 : vector<12x32xi1>, vector<12x32xf32>
    %74 = vector.shape_cast %73 : vector<12x32xf32> to vector<1x12x32xf32>
    %75 = vector.broadcast %14 : vector<1x12x1xf32> to vector<1x12x32xf32>
    %76 = arith.mulf %74, %75 : vector<1x12x32xf32>
    %77 = vector.extract_strided_slice %76 {offsets = [0, 2, 0], sizes = [1, 8, 32], strides = [1, 1, 1]} : vector<1x12x32xf32> to vector<1x8x32xf32>
    %78 = vector.shape_cast %77 : vector<1x8x32xf32> to vector<8x32xf32>
    %c0_65 = arith.constant 0 : index
    %c0_66 = arith.constant 0 : index
    %79 = vector.load %arg6[%c0_65, %c0_66] : memref<32x64xf32, #tpu.memory_space<vmem>>, vector<32x64xf32>
    %cst_67 = arith.constant dense<0.000000e+00> : vector<8x64xf32>
    %80 = tpu.matmul %78, %79, %cst_67 {dimension_numbers = #tpu.dot_dimension_numbers<[1], [0], [0], [1], [0, 0, 1, 1], [], []>} : vector<8x32xf32>, vector<32x64xf32>, vector<8x64xf32> -> vector<8x64xf32>
    %81 = vector.shape_cast %80 : vector<8x64xf32> to vector<1x8x64xf32>
    %c0_68 = arith.constant 0 : index
    %c0_69 = arith.constant 0 : index
    %c0_70 = arith.constant 0 : index
    %82 = vector.load %arg7[%c0_68, %c0_69, %c0_70] : memref<1x8x64xf32, #tpu.memory_space<vmem>>, vector<1x8x64xf32>
    tpu.vector_store %arg7[%c0_68, %c0_69, %c0_70], %81 {strides = array<i32>} : memref<1x8x64xf32, #tpu.memory_space<vmem>>, vector<1x8x64xf32>,
    return
  }
  func.func @transform_0(%arg0: i32, %arg1: i32) -> (i32, i32, i32, i32) {
    %c0_i32 = arith.constant 0 : i32
    %c0_i32_0 = arith.constant 0 : i32
    %c0_i32_1 = arith.constant 0 : i32
    return %arg0, %arg1, %c0_i32, %c0_i32_0 : i32, i32, i32, i32
  }
  func.func @transform_1(%arg0: i32, %arg1: i32) -> (i32, i32, i32, i32) {
    %c0_i32 = arith.constant 0 : i32
    %c0_i32_0 = arith.constant 0 : i32
    %c0_i32_1 = arith.constant 0 : i32
    %c0_i32_2 = arith.constant 0 : i32
    %c0_i32_3 = arith.constant 0 : i32
    return %c0_i32, %c0_i32_0, %c0_i32_1, %c0_i32_2 : i32, i32, i32, i32
  }
  func.func @transform_2(%arg0: i32, %arg1: i32) -> (i32, i32, i32) {
    %c0_i32 = arith.constant 0 : i32
    %c0_i32_0 = arith.constant 0 : i32
    %c0_i32_1 = arith.constant 0 : i32
    %c0_i32_2 = arith.constant 0 : i32
    return %c0_i32, %c0_i32_0, %c0_i32_1 : i32, i32, i32
  }
  func.func @transform_3(%arg0: i32, %arg1: i32) -> i32 {
    %c0_i32 = arith.constant 0 : i32
    %c0_i32_0 = arith.constant 0 : i32
    return %c0_i32 : i32
  }
  func.func @transform_4(%arg0: i32, %arg1: i32) -> (i32, i32) {
    %c0_i32 = arith.constant 0 : i32
    %c0_i32_0 = arith.constant 0 : i32
    %c0_i32_1 = arith.constant 0 : i32
    return %c0_i32, %c0_i32_0 : i32, i32
  }
  func.func @transform_5(%arg0: i32, %arg1: i32) -> (i32, i32, i32) {
    %c0_i32 = arith.constant 0 : i32
    %c0_i32_0 = arith.constant 0 : i32
    return %arg0, %arg1, %c0_i32 : i32, i32, i32
  }
}

</mosaic_0001>

<llo_original>
// kernel: tpu_custom_call.1
$region0: #{tpu_custom_call.1}
  #allocation0 [shape = 'u32[]', space=smem, size = 0x4, offset = 0x4, fixed_abs, tag = 'smem constant byte address 0x4 - core index']
  #allocation1 [shape = 'u32[72,128]{1,0:T(1,128)}', space=vmem, size = 0x9000, scoped, tag = 'internal scratch']
  #allocation2 [shape = 'f32[1,14,32]{2,1,0:T(8,128)}', space=vmem, size = 0x2000, scoped, tag = 'scratch operand']
  %s0 = inlined_call_operand.vmem [shape: f32[2,1,12,32], index: 0, kind: input, shape index: {}]
  %s1 = inlined_call_operand.hbm [shape: f32[2,3,32,32], index: 1, kind: input, shape index: {}]
  %s2 = inlined_call_operand.vmem [shape: f32[2,1,32], index: 2, kind: input, shape index: {}]
  %s3 = inlined_call_operand.vmem [shape: f32[2], index: 3, kind: input, shape index: {}]
  %s4 = inlined_call_operand.vmem [shape: f32[32,64], index: 4, kind: input, shape index: {}]
  %s5 = inlined_call_operand.hbm [shape: f32[2,8,64], index: 5, kind: output, shape index: {}]
  %s6 = sld [smem:[#allocation0]]
  $region61: #{tpu_custom_call.1} parent=0
    _
  %s8 = ssub.s32 1, %s6
  %s9 = scalar_select 0, %s8, %s6
  $region1: #{tpu_custom_call.1} parent=0
    #allocation3 [shape = 'u8[98304]{0}', space=vmem, size = 0x18000, scoped, tag = 'input window, operand 1, single buffered']
    #allocation4 [shape = 's32[2]{0}', space=sflag, size = 0x8, scoped, tag = 'scoped memory for tpu_custom_call.1']
    #allocation5 [shape = 's32[2]{0}', space=sflag, size = 0x8, scoped, tag = 'scoped memory for tpu_custom_call.1']
    #allocation6 [shape = 's32[2]{0}', space=sflag, size = 0x8, scoped, tag = 'scoped memory for tpu_custom_call.1']
    #allocation7 [shape = 'u8[512]{0}', space=smem, size = 0x200, scoped, tag = 'input window, operand 3, single buffered']
    #allocation8 [shape = 'u8[8192]{0}', space=vmem, size = 0x2000, scoped, tag = 'output window, operand 0']
    %10 = vsyncpa [#allocation4], 0
    %11 = vsyncpa [#allocation6], 0
    %12 = vsyncpa [#allocation5], 0
    %s13 = scalar_lea.sflag [#allocation5], 1
    %14 = vsyncpa %s13, 0
    loop: start=0, step=1, limit=4
    $region2: #{tpu_custom_call.1} parent=1 // loop_pre_header
      _
    $region3: #{tpu_custom_call.1} parent=1 // loop_header
      %s16 = sphi 0, %s20
      %p17 = scmp.ge.s32.totalorder %s16, 4
      %s23 = sphi 0, %s35
      %s24 = sphi 0, %s31
      %s25 = sphi 0, %s23
      %s26 = sphi 0, %s24
      %s27 = sphi 0, %s25
      %s28 = sphi 0, %s26
      %s40 = sphi 0, %s42
      %s43 = sphi 0, %s40
      %s44 = sphi 0, %s43
      %s60 = sphi 0, %s44
      %s64 = sphi 0, %s64
      %s66 = sphi 0, %s64
      %s67 = sphi 0, %s66
      %s81 = sphi 0, %s67
      %s85 = sphi 0, %s85
      %s87 = sphi 0, %s85
      %s88 = sphi 0, %s87
      %s102 = sphi 0, %s88
      %s106 = sphi 0, %s106
      %s108 = sphi 0, %s106
      %s109 = sphi 0, %s108
      %s123 = sphi 0, %s109
      %s127 = sphi 0, %s127
      %s129 = sphi 0, %s127
      %s130 = sphi 0, %s129
      %s144 = sphi 0, %s130
      %s152 = sphi 0, %s154
      %s155 = sphi 0, %s152
      %s156 = sphi 0, %s155
      %s172 = sphi 0, %s156
    $region4: #{tpu_custom_call.1} parent=1 // loop_header_branch
      %19 = sbr.rel (%p17) target = $region8
    $region5: #{tpu_custom_call.1} parent=1 // loop_body
      %s21 = ssub.s32 %s16, 1
      %s22 = ssub.s32 %s16, 2
      %s29 = sadd.s32 1, %s24
      %p30 = scmp.ge.s32.totalorder %s29, 1
      %s31 = scalar_select %p30, 0, %s29
      %s32 = sadd.s32 1, %s23
      %s33 = scalar_select %p30, %s32, %s23
      %p34 = scmp.ge.s32.totalorder %s33, 2
      %s35 = scalar_select %p34, 0, %s33
      %s36 = ssub.s32 %s23, %s35
      %s37 = ssub.s32 %s24, %s31
      %s38 = sor.u32 %s36, %s37
      %p39 = scmp.eq.s32.totalorder %s38, 0
      %s41 = sadd.s32 %s40, 1
      %s42 = scalar_select %p39, %s40, %s41
      %p45 = pneg %p39
      %p46 = scmp.eq.s32.totalorder %s16, 1
      %p47 = por %p45, %p46
      %p48 = scmp.ne.s32.totalorder %s40, %s43
      %p49 = scmp.eq.s32.totalorder %s16, 0
      %p50 = por %p48, %p49
      %p51 = scmp.ne.s32.totalorder %s40, %s43
      %p52 = scmp.eq.s32.totalorder %s21, 1
      %p53 = por %p51, %p52
      %p54 = scmp.ne.s32.totalorder %s43, %s44
      %p55 = scmp.eq.s32.totalorder %s21, 0
      %p56 = por %p54, %p55
      %p57 = scmp.ne.s32.totalorder %s43, %s44
      %p58 = scmp.eq.s32.totalorder %s22, 1
      %p59 = por %p57, %p58
      %p61 = scmp.ne.s32.totalorder %s44, %s60
      %p62 = scmp.eq.s32.totalorder %s22, 0
      %p63 = por %p61, %p62
      %s65 = sadd.s32 %s64, 1
      %p68 = scmp.eq.s32.totalorder %s16, 1
      %p69 = scmp.ne.s32.totalorder %s64, %s66
      %p70 = scmp.eq.s32.totalorder %s16, 0
      %p71 = por %p69, %p70
      %p72 = scmp.ne.s32.totalorder %s64, %s66
      %p73 = scmp.eq.s32.totalorder %s21, 1
      %p74 = por %p72, %p73
      %p75 = scmp.ne.s32.totalorder %s66, %s67
      %p76 = scmp.eq.s32.totalorder %s21, 0
      %p77 = por %p75, %p76
      %p78 = scmp.ne.s32.totalorder %s66, %s67
      %p79 = scmp.eq.s32.totalorder %s22, 1
      %p80 = por %p78, %p79
      %p82 = scmp.ne.s32.totalorder %s67, %s81
      %p83 = scmp.eq.s32.totalorder %s22, 0
      %p84 = por %p82, %p83
      %s86 = sadd.s32 %s85, 1
      %p89 = scmp.eq.s32.totalorder %s16, 1
      %p90 = scmp.ne.s32.totalorder %s85, %s87
      %p91 = scmp.eq.s32.totalorder %s16, 0
      %p92 = por %p90, %p91
      %p93 = scmp.ne.s32.totalorder %s85, %s87
      %p94 = scmp.eq.s32.totalorder %s21, 1
      %p95 = por %p93, %p94
      %p96 = scmp.ne.s32.totalorder %s87, %s88
      %p97 = scmp.eq.s32.totalorder %s21, 0
      %p98 = por %p96, %p97
      %p99 = scmp.ne.s32.totalorder %s87, %s88
      %p100 = scmp.eq.s32.totalorder %s22, 1
      %p101 = por %p99, %p100
      %p103 = scmp.ne.s32.totalorder %s88, %s102
      %p104 = scmp.eq.s32.totalorder %s22, 0
      %p105 = por %p103, %p104
      %s107 = sadd.s32 %s106, 1
      %p110 = scmp.eq.s32.totalorder %s16, 1
      %p111 = scmp.ne.s32.totalorder %s106, %s108
      %p112 = scmp.eq.s32.totalorder %s16, 0
      %p113 = por %p111, %p112
      %p114 = scmp.ne.s32.totalorder %s106, %s108
      %p115 = scmp.eq.s32.totalorder %s21, 1
      %p116 = por %p114, %p115
      %p117 = scmp.ne.s32.totalorder %s108, %s109
      %p118 = scmp.eq.s32.totalorder %s21, 0
      %p119 = por %p117, %p118
      %p120 = scmp.ne.s32.totalorder %s108, %s109
      %p121 = scmp.eq.s32.totalorder %s22, 1
      %p122 = por %p120, %p121
      %p124 = scmp.ne.s32.totalorder %s109, %s123
      %p125 = scmp.eq.s32.totalorder %s22, 0
      %p126 = por %p124, %p125
      %s128 = sadd.s32 %s127, 1
      %p131 = scmp.eq.s32.totalorder %s16, 1
      %p132 = scmp.ne.s32.totalorder %s127, %s129
      %p133 = scmp.eq.s32.totalorder %s16, 0
      %p134 = por %p132, %p133
      %p135 = scmp.ne.s32.totalorder %s127, %s129
      %p136 = scmp.eq.s32.totalorder %s21, 1
      %p137 = por %p135, %p136
      %p138 = scmp.ne.s32.totalorder %s129, %s130
      %p139 = scmp.eq.s32.totalorder %s21, 0
      %p140 = por %p138, %p139
      %p141 = scmp.ne.s32.totalorder %s129, %s130
      %p142 = scmp.eq.s32.totalorder %s22, 1
      %p143 = por %p141, %p142
      %p145 = scmp.ne.s32.totalorder %s130, %s144
      %p146 = scmp.eq.s32.totalorder %s22, 0
      %p147 = por %p145, %p146
      %s148 = ssub.s32 %s23, %s35
      %s149 = ssub.s32 %s24, %s31
      %s150 = sor.u32 %s148, %s149
      %p151 = scmp.eq.s32.totalorder %s150, 0
      %s153 = sadd.s32 %s152, 1
      %s154 = scalar_select %p151, %s152, %s153
      %p157 = pneg %p151
      %p158 = scmp.eq.s32.totalorder %s16, 1
      %p159 = por %p157, %p158
      %p160 = scmp.ne.s32.totalorder %s152, %s155
      %p161 = scmp.eq.s32.totalorder %s16, 0
      %p162 = por %p160, %p161
      %p163 = scmp.ne.s32.totalorder %s152, %s155
      %p164 = scmp.eq.s32.totalorder %s21, 1
      %p165 = por %p163, %p164
      %p166 = scmp.ne.s32.totalorder %s155, %s156
      %p167 = scmp.eq.s32.totalorder %s21, 0
      %p168 = por %p166, %p167
      %p169 = scmp.ne.s32.totalorder %s155, %s156
      %p170 = scmp.eq.s32.totalorder %s22, 1
      %p171 = por %p169, %p170
      %p173 = scmp.ne.s32.totalorder %s156, %s172
      %p174 = scmp.eq.s32.totalorder %s22, 0
      %p175 = por %p173, %p174
      %p176 = scmp.le.s32.totalorder 1, %s16
      %p177 = scmp.lt.s32.totalorder %s16, 3
      %p178 = pnand %p176, %p177
      %p179 = pneg %p178
      // Predicated region
      $region9: #{tpu_custom_call.1} parent=5 // pred_check
        _
      $region10: #{tpu_custom_call.1} parent=5 // pred_check_branch
        %181 = sbr.rel (%p178) target = $region12
      $region11: #{tpu_custom_call.1} parent=5 // pred_region
        %s182 = ssub.s32 %s16, 1
        // Predicated region
        $region13: #{tpu_custom_call.1} parent=11 // pred_check
          %p183 = pneg %p77
        $region14: #{tpu_custom_call.1} parent=11 // pred_check_branch
          %185 = sbr.rel (%p183) target = $region16
        $region15: #{tpu_custom_call.1} parent=11 // pred_region
          %187 = vsyncadd [#allocation4], 0
          %s188 = sshll.u32 %s1, 4
          %s189 = int_to_ptr.hbm [resolvable:$true] %s188
          %s190 = sshll.u32 [#allocation3], 4
          %s191 = int_to_ptr.vmem [resolvable:$true] %s190
          %196 = dma.hbm_to_vmem [thread:$0]  %s189, 3072, %s191, [#allocation4], 128, 128, 8
        $region16: #{tpu_custom_call.1} parent=11 // pred_fallthru
          _
        // Predicated region
        $region17: #{tpu_custom_call.1} parent=11 // pred_check
          %p197 = pneg %p98
        $region18: #{tpu_custom_call.1} parent=11 // pred_check_branch
          %199 = sbr.rel (%p197) target = $region20
        $region19: #{tpu_custom_call.1} parent=11 // pred_region
          _
        $region20: #{tpu_custom_call.1} parent=11 // pred_fallthru
          _
        // Predicated region
        $region21: #{tpu_custom_call.1} parent=11 // pred_check
          %p200 = pneg %p119
        $region22: #{tpu_custom_call.1} parent=11 // pred_check_branch
          %202 = sbr.rel (%p200) target = $region24
        $region23: #{tpu_custom_call.1} parent=11 // pred_region
          %204 = vsyncadd [#allocation6], 0
          %s206 = sshll.u32 %s3, 4
          %s207 = int_to_ptr.vmem [resolvable:$true] %s206
          %209 = dma.vmem_to_smem %s207, 16, [#allocation7], [#allocation6]
        $region24: #{tpu_custom_call.1} parent=11 // pred_fallthru
          _
        // Predicated region
        $region25: #{tpu_custom_call.1} parent=11 // pred_check
          %p210 = pneg %p140
        $region26: #{tpu_custom_call.1} parent=11 // pred_check_branch
          %212 = sbr.rel (%p210) target = $region28
        $region27: #{tpu_custom_call.1} parent=11 // pred_region
          _
        $region28: #{tpu_custom_call.1} parent=11 // pred_fallthru
          _
      $region12: #{tpu_custom_call.1} parent=5 // pred_fallthru
        _
      %p213 = scmp.lt.s32.totalorder %s16, 2
      // Predicated region
      $region29: #{tpu_custom_call.1} parent=5 // pred_check
        %p214 = pneg %p213
      $region30: #{tpu_custom_call.1} parent=5 // pred_check_branch
        %216 = sbr.rel (%p214) target = $region32
      $region31: #{tpu_custom_call.1} parent=5 // pred_region
        // Predicated region
        $region33: #{tpu_custom_call.1} parent=31 // pred_check
          %p217 = pneg %p50
        $region34: #{tpu_custom_call.1} parent=31 // pred_check_branch
          %219 = sbr.rel (%p217) target = $region36
        $region35: #{tpu_custom_call.1} parent=31 // pred_region
          %p220 = scmp.lt.s32.totalorder %s23, 1
          %s221 = scalar_select %p220, %s23, 1
          %p222 = scmp.lt.s32.totalorder %s24, 0
          %s223 = scalar_select %p222, %s24, 0
          %s224 = smul.addr %s223, 2
          %s225 = smul.addr %s221, 2
          %s226 = sadd.s32 %s224, %s225
          %s227 = smul.addr %s226, 8
          %s228 = scalar_lea.vmem %s0, %s227
        $region36: #{tpu_custom_call.1} parent=31 // pred_fallthru
          _
      $region32: #{tpu_custom_call.1} parent=5 // pred_fallthru
        _
      %p229 = scmp.le.s32.totalorder 1, %s16
      %p230 = scmp.lt.s32.totalorder %s16, 3
      %p231 = pnand %p229, %p230
      %p232 = pneg %p231
      // Predicated region
      $region37: #{tpu_custom_call.1} parent=5 // pred_check
        _
      $region38: #{tpu_custom_call.1} parent=5 // pred_check_branch
        %234 = sbr.rel (%p231) target = $region40
      $region39: #{tpu_custom_call.1} parent=5 // pred_region
        %s235 = ssub.s32 %s16, 1
        // Predicated region
        $region41: #{tpu_custom_call.1} parent=39 // pred_check
          %p236 = pneg %p77
        $region42: #{tpu_custom_call.1} parent=39 // pred_check_branch
          %238 = sbr.rel (%p236) target = $region44
        $region43: #{tpu_custom_call.1} parent=39 // pred_region
          %240 = dma.done [#allocation4], 3072
        $region44: #{tpu_custom_call.1} parent=39 // pred_fallthru
          _
        // Predicated region
        $region45: #{tpu_custom_call.1} parent=39 // pred_check
          %p241 = pneg %p119
        $region46: #{tpu_custom_call.1} parent=39 // pred_check_branch
          %243 = sbr.rel (%p241) target = $region48
        $region47: #{tpu_custom_call.1} parent=39 // pred_region
          %245 = dma.done [#allocation6], 16
        $region48: #{tpu_custom_call.1} parent=39 // pred_fallthru
          _
        %246 = sfence
        %p247 = scmp.lt.s32.totalorder %s25, 1
        %s248 = scalar_select %p247, %s25, 1
        %p249 = scmp.lt.s32.totalorder %s26, 0
        %s250 = scalar_select %p249, %s26, 0
        %s251 = smul.addr %s250, 2
        %s252 = smul.addr %s248, 2
        %s253 = sadd.s32 %s251, %s252
        %s254 = smul.addr %s253, 8
        %s255 = scalar_lea.vmem %s0, %s254
        %p256 = pneg %p56
        %p257 = pneg %p53
        %p258 = pneg %p77
        %p259 = pneg %p74
        %p260 = pneg %p98
        %p261 = pneg %p95
        %p262 = pneg %p119
        %p263 = pneg %p116
        %p264 = pneg %p140
        %p265 = pneg %p137
        %p266 = pneg %p168
        %p267 = pneg %p165
        %s268 = sand.u32 %s155, 1
        %s269 = scalar_lea.sflag [#allocation5], %s268
        %s270 = sand.u32 %s155, 1
        %s271 = smul.addr %s270, 8
        %s272 = scalar_lea.vmem [#allocation8], %s271
        %p273 = scmp.lt.s32.totalorder %s25, 1
        %s274 = scalar_select %p273, %s25, 1
        %p275 = scmp.lt.s32.totalorder %s26, 0
        %s276 = scalar_select %p275, %s26, 0
        %s277 = smul.addr %s276, 2
        %s278 = smul.addr %s274, 2
        %s279 = sadd.s32 %s277, %s278
        %s280 = smul.addr %s279, 8
        %s281 = scalar_lea.vmem %s0, %s280
        %vm282 = vcmask 253952
        %283 = vst.msk [vmem:[#allocation2] sm:$0x1] %vm282, 0.0
        %284 = vst.msk [vmem:[#allocation2 + $0xd] sm:$0x1] %vm282, 0.0
        %s285 = smul.u32 %s26, 8
        %s286 = ssub.s32 %s285, 2
        %v287 = vlaneseq
        %v288 = vshrl.u32 %v287, 7
        %v289 = vadd.s32 %v288, 8
        %v290 = vstv %s286
        %v291 = vadd.s32 %v290, %v288
        %v292 = vadd.s32 %v290, %v289
        %vm293 = vcmp.ge.s32.totalorder %v291, 0
        %vm294 = vcmp.ge.s32.totalorder %v292, 0
        %vm295 = vcmp.lt.s32.totalorder %v291, 8
        %vm296 = vcmp.lt.s32.totalorder %v292, 8
        %vm297 = vmand %vm293, %vm295
        %vm298 = vmand %vm294, %vm296
        %v299 = vsel %vm297, 1, 0
        %v300 = vsel %vm298, 1, 0
        %v301 = vcvt.s32.f32 %v299
        %v302 = vcvt.s32.f32 %v300
        %v303 = vld [vmem:[%s281] sm:$0xff]
        %v304 = vld [vmem:[%s281 + $0x8] sm:$0xf]
        %vm305 = vcmask 261120
        %306 = vst.msk [vmem:[#allocation2 + $0x1] sm:$0xff] %vm305, %v303
        %vm307 = vcmask 257024
        %308 = vst.msk [vmem:[#allocation2 + $0x9] sm:$0xf] %vm307, %v304
        %v309 = vld [vmem:[#allocation2 + $0x2] sm:$0xff]
        %v310 = vld [vmem:[#allocation2 + $0xa] sm:$0xf]
        %v311 = vld [vmem:[#allocation2] sm:$0xff]
        %v312 = vld [vmem:[#allocation2 + $0x8] sm:$0xf]
        %v313 = vld [vmem:[#allocation3] sm:$0xff]
        %v314 = vld [vmem:[#allocation3 + $0x8] sm:$0xff]
        %v315 = vld [vmem:[#allocation3 + $0x10] sm:$0xff]
        %v316 = vld [vmem:[#allocation3 + $0x18] sm:$0xff]
        %s317 = scalar_lea.vmem [#allocation3], 32
        %v318 = vld [vmem:[%s317] sm:$0xff]
        %v319 = vld [vmem:[%s317 + $0x8] sm:$0xff]
        %v320 = vld [vmem:[%s317 + $0x10] sm:$0xff]
        %v321 = vld [vmem:[%s317 + $0x18] sm:$0xff]
        %v323 = vsel %vm305, %v303, 0
        %v326 = vsel %vm305, %v304, 0
        %328 = vmatpush.msra.mxu0 0.0
        %329 = vmatpush.msra.mxu0 0.0
        %330 = vmatpush.msra.mxu0 0.0
        %331 = vmatpush.msra.mxu0 0.0
        %332 = vmatpush.msra.mxu0 0.0
        %333 = vmatpush.msra.mxu0 0.0
        %334 = vmatpush.msra.mxu0 0.0
        %335 = vmatpush.msra.mxu0 0.0
        %336 = vmatpush.msra.mxu0 0.0
        %337 = vmatpush.msra.mxu0 0.0
        %338 = vmatpush.msra.mxu0 0.0
        %339 = vmatpush.msra.mxu0 0.0
        %340 = vmatpush.msra.mxu0 %v321
        %341 = vmatpush.msra.mxu0 %v320
        %342 = vmatpush.msra.mxu0 %v319
        %343 = vmatpush.msra.mxu0 %v318
        %344 = vmatmul.f32.gmra.mxu0 %v323
        %v345 = vpop.f32.mrf.mxu0
        %v346 = vadd.f32 0.0, %v345
        %347 = vmatmul.f32.gmra.mxu0 %v326
        %v348 = vpop.f32.mrf.mxu0
        %v349 = vadd.f32 0.0, %v348
        %350 = vdwg.mxu0
        %v352 = vsel %vm305, %v309, 0
        %v355 = vsel %vm305, %v310, 0
        %357 = vmatpush.msra.mxu0 0.0
        %358 = vmatpush.msra.mxu0 0.0
        %359 = vmatpush.msra.mxu0 0.0
        %360 = vmatpush.msra.mxu0 0.0
        %361 = vmatpush.msra.mxu0 0.0
        %362 = vmatpush.msra.mxu0 0.0
        %363 = vmatpush.msra.mxu0 0.0
        %364 = vmatpush.msra.mxu0 0.0
        %365 = vmatpush.msra.mxu0 0.0
        %366 = vmatpush.msra.mxu0 0.0
        %367 = vmatpush.msra.mxu0 0.0
        %368 = vmatpush.msra.mxu0 0.0
        %369 = vmatpush.msra.mxu0 %v316
        %370 = vmatpush.msra.mxu0 %v315
        %371 = vmatpush.msra.mxu0 %v314
        %372 = vmatpush.msra.mxu0 %v313
        %373 = vmatmul.f32.gmra.mxu0 %v352
        %v374 = vpop.f32.mrf.mxu0
        %v375 = vadd.f32 %v346, %v374
        %376 = vmatmul.f32.gmra.mxu0 %v355
        %v377 = vpop.f32.mrf.mxu0
        %v378 = vadd.f32 %v349, %v377
        %379 = vdwg.mxu0
        %s380 = scalar_lea.vmem [#allocation3], 64
        %v381 = vld [vmem:[%s380] sm:$0xff]
        %v382 = vld [vmem:[%s380 + $0x8] sm:$0xff]
        %v383 = vld [vmem:[%s380 + $0x10] sm:$0xff]
        %v384 = vld [vmem:[%s380 + $0x18] sm:$0xff]
        %v386 = vsel %vm305, %v311, 0
        %v389 = vsel %vm305, %v312, 0
        %391 = vmatpush.msra.mxu0 0.0
        %392 = vmatpush.msra.mxu0 0.0
        %393 = vmatpush.msra.mxu0 0.0
        %394 = vmatpush.msra.mxu0 0.0
        %395 = vmatpush.msra.mxu0 0.0
        %396 = vmatpush.msra.mxu0 0.0
        %397 = vmatpush.msra.mxu0 0.0
        %398 = vmatpush.msra.mxu0 0.0
        %399 = vmatpush.msra.mxu0 0.0
        %400 = vmatpush.msra.mxu0 0.0
        %401 = vmatpush.msra.mxu0 0.0
        %402 = vmatpush.msra.mxu0 0.0
        %403 = vmatpush.msra.mxu0 %v384
        %404 = vmatpush.msra.mxu0 %v383
        %405 = vmatpush.msra.mxu0 %v382
        %406 = vmatpush.msra.mxu0 %v381
        %407 = vmatmul.f32.gmra.mxu0 %v386
        %v408 = vpop.f32.mrf.mxu0
        %v409 = vadd.f32 0.0, %v408
        %410 = vmatmul.f32.gmra.mxu0 %v389
        %v411 = vpop.f32.mrf.mxu0
        %v412 = vadd.f32 0.0, %v411
        %413 = vdwg.mxu0
        %v414 = vadd.f32 %v375, %v409
        %v415 = vadd.f32 %v378, %v412
        %v416 = vld [vmem:[%s2] sm:$0x1]
        %v418 = vperm.slane %v416, 0
        %v420 = vadd.f32 %v414, %v418
        %v421 = vadd.f32 %v415, %v418
        %s422 = sld [smem:[#allocation7]]
        %vm423 = vcmp.gt.f32.partialorder %v420, 0.0
        %vm424 = vcmp.gt.f32.partialorder %v421, 0.0
        %v425 = vstv %s422
        %v426 = vmul.f32 %v425, %v420
        %v427 = vmul.f32 %v425, %v421
        %v428 = vsel %vm423, %v420, %v426
        %v429 = vsel %vm424, %v421, %v427
        %v430 = vmul.f32 %v428, %v301
        %v431 = vmul.f32 %v429, %v302
        %432 = vst.msk [vmem:[#allocation2 + $0x1] sm:$0xff] %vm305, %v430
        %433 = vst.msk [vmem:[#allocation2 + $0x9] sm:$0xf] %vm307, %v431
        %v434 = vld [vmem:[#allocation2 + $0x2] sm:$0xff]
        %v435 = vld [vmem:[#allocation2 + $0xa] sm:$0xf]
        %v436 = vld [vmem:[#allocation2] sm:$0xff]
        %v437 = vld [vmem:[#allocation2 + $0x8] sm:$0xf]
        %s438 = scalar_lea.vmem [#allocation3], 96
        %v439 = vld [vmem:[%s438] sm:$0xff]
        %v440 = vld [vmem:[%s438 + $0x8] sm:$0xff]
        %v441 = vld [vmem:[%s438 + $0x10] sm:$0xff]
        %v442 = vld [vmem:[%s438 + $0x18] sm:$0xff]
        %s443 = scalar_lea.vmem [#allocation3], 128
        %v444 = vld [vmem:[%s443] sm:$0xff]
        %v445 = vld [vmem:[%s443 + $0x8] sm:$0xff]
        %v446 = vld [vmem:[%s443 + $0x10] sm:$0xff]
        %v447 = vld [vmem:[%s443 + $0x18] sm:$0xff]
        %v449 = vsel %vm305, %v430, 0
        %v452 = vsel %vm305, %v431, 0
        %454 = vmatpush.msra.mxu0 0.0
        %455 = vmatpush.msra.mxu0 0.0
        %456 = vmatpush.msra.mxu0 0.0
        %457 = vmatpush.msra.mxu0 0.0
        %458 = vmatpush.msra.mxu0 0.0
        %459 = vmatpush.msra.mxu0 0.0
        %460 = vmatpush.msra.mxu0 0.0
        %461 = vmatpush.msra.mxu0 0.0
        %462 = vmatpush.msra.mxu0 0.0
        %463 = vmatpush.msra.mxu0 0.0
        %464 = vmatpush.msra.mxu0 0.0
        %465 = vmatpush.msra.mxu0 0.0
        %466 = vmatpush.msra.mxu0 %v447
        %467 = vmatpush.msra.mxu0 %v446
        %468 = vmatpush.msra.mxu0 %v445
        %469 = vmatpush.msra.mxu0 %v444
        %470 = vmatmul.f32.gmra.mxu0 %v449
        %v471 = vpop.f32.mrf.mxu0
        %v472 = vadd.f32 0.0, %v471
        %473 = vmatmul.f32.gmra.mxu0 %v452
        %v474 = vpop.f32.mrf.mxu0
        %v475 = vadd.f32 0.0, %v474
        %476 = vdwg.mxu0
        %v478 = vsel %vm305, %v434, 0
        %v481 = vsel %vm305, %v435, 0
        %483 = vmatpush.msra.mxu0 0.0
        %484 = vmatpush.msra.mxu0 0.0
        %485 = vmatpush.msra.mxu0 0.0
        %486 = vmatpush.msra.mxu0 0.0
        %487 = vmatpush.msra.mxu0 0.0
        %488 = vmatpush.msra.mxu0 0.0
        %489 = vmatpush.msra.mxu0 0.0
        %490 = vmatpush.msra.mxu0 0.0
        %491 = vmatpush.msra.mxu0 0.0
        %492 = vmatpush.msra.mxu0 0.0
        %493 = vmatpush.msra.mxu0 0.0
        %494 = vmatpush.msra.mxu0 0.0
        %495 = vmatpush.msra.mxu0 %v442
        %496 = vmatpush.msra.mxu0 %v441
        %497 = vmatpush.msra.mxu0 %v440
        %498 = vmatpush.msra.mxu0 %v439
        %499 = vmatmul.f32.gmra.mxu0 %v478
        %v500 = vpop.f32.mrf.mxu0
        %v501 = vadd.f32 %v472, %v500
        %502 = vmatmul.f32.gmra.mxu0 %v481
        %v503 = vpop.f32.mrf.mxu0
        %v504 = vadd.f32 %v475, %v503
        %505 = vdwg.mxu0
        %s506 = scalar_lea.vmem [#allocation3], 160
        %v507 = vld [vmem:[%s506] sm:$0xff]
        %v508 = vld [vmem:[%s506 + $0x8] sm:$0xff]
        %v509 = vld [vmem:[%s506 + $0x10] sm:$0xff]
        %v510 = vld [vmem:[%s506 + $0x18] sm:$0xff]
        %v512 = vsel %vm305, %v436, 0
        %v515 = vsel %vm305, %v437, 0
        %517 = vmatpush.msra.mxu0 0.0
        %518 = vmatpush.msra.mxu0 0.0
        %519 = vmatpush.msra.mxu0 0.0
        %520 = vmatpush.msra.mxu0 0.0
        %521 = vmatpush.msra.mxu0 0.0
        %522 = vmatpush.msra.mxu0 0.0
        %523 = vmatpush.msra.mxu0 0.0
        %524 = vmatpush.msra.mxu0 0.0
        %525 = vmatpush.msra.mxu0 0.0
        %526 = vmatpush.msra.mxu0 0.0
        %527 = vmatpush.msra.mxu0 0.0
        %528 = vmatpush.msra.mxu0 0.0
        %529 = vmatpush.msra.mxu0 %v510
        %530 = vmatpush.msra.mxu0 %v509
        %531 = vmatpush.msra.mxu0 %v508
        %532 = vmatpush.msra.mxu0 %v507
        %533 = vmatmul.f32.gmra.mxu0 %v512
        %v534 = vpop.f32.mrf.mxu0
        %v535 = vadd.f32 0.0, %v534
        %536 = vmatmul.f32.gmra.mxu0 %v515
        %v537 = vpop.f32.mrf.mxu0
        %v538 = vadd.f32 0.0, %v537
        %539 = vdwg.mxu0
        %v540 = vadd.f32 %v501, %v535
        %v541 = vadd.f32 %v504, %v538
        %s542 = scalar_lea.vmem %s2, 1
        %v543 = vld [vmem:[%s542] sm:$0x1]
        %v545 = vperm.slane %v543, 0
        %v547 = vadd.f32 %v540, %v545
        %v548 = vadd.f32 %v541, %v545
        %s549 = sld [smem:[#allocation7 + $0x1]]
        %vm550 = vcmp.gt.f32.partialorder %v547, 0.0
        %vm551 = vcmp.gt.f32.partialorder %v548, 0.0
        %v552 = vstv %s549
        %v553 = vmul.f32 %v552, %v547
        %v554 = vmul.f32 %v552, %v548
        %v555 = vsel %vm550, %v547, %v553
        %v556 = vsel %vm551, %v548, %v554
        %v557 = vmul.f32 %v555, %v301
        %v558 = vmul.f32 %v556, %v302
        %v559 = vld [vmem:[%s4] sm:$0xff]
        %v560 = vld [vmem:[%s4 + $0x8] sm:$0xff]
        %v561 = vld [vmem:[%s4 + $0x10] sm:$0xff]
        %v562 = vld [vmem:[%s4 + $0x18] sm:$0xff]
        %vm565 = vcmask 1045504
        %v566 = vrot.slane %v557, 2
        %v567 = vrot.slane %v558, 2
        %v568 = vsel %vm565, %v566, %v567
        %v569 = vsel %vm305, %v568, 0
        %571 = vmatpush.msra.mxu0 0.0
        %572 = vmatpush.msra.mxu0 0.0
        %573 = vmatpush.msra.mxu0 0.0
        %574 = vmatpush.msra.mxu0 0.0
        %575 = vmatpush.msra.mxu0 0.0
        %576 = vmatpush.msra.mxu0 0.0
        %577 = vmatpush.msra.mxu0 0.0
        %578 = vmatpush.msra.mxu0 0.0
        %579 = vmatpush.msra.mxu0 0.0
        %580 = vmatpush.msra.mxu0 0.0
        %581 = vmatpush.msra.mxu0 0.0
        %582 = vmatpush.msra.mxu0 0.0
        %583 = vmatpush.msra.mxu0 %v562
        %584 = vmatpush.msra.mxu0 %v561
        %585 = vmatpush.msra.mxu0 %v560
        %586 = vmatpush.msra.mxu0 %v559
        %587 = vmatmul.f32.gmra.mxu0 %v569
        %v588 = vpop.f32.mrf.mxu0
        %v589 = vadd.f32 0.0, %v588
        %590 = vdwg.mxu0
        %vm591 = vcmask 523264
        %592 = vst.msk [vmem:[%s272] sm:$0xff] %vm591, %v589
        %s593 = sand.u32 %s155, 1
        %s594 = scalar_lea.sflag [#allocation5], %s593
        %s595 = sand.u32 %s155, 1
        %s596 = smul.addr %s595, 8
        %s597 = scalar_lea.vmem [#allocation8], %s596
        // Predicated region
        $region49: #{tpu_custom_call.1} parent=39 // pred_check
          %p598 = pneg %p165
        $region50: #{tpu_custom_call.1} parent=39 // pred_check_branch
          %600 = sbr.rel (%p598) target = $region52
        $region51: #{tpu_custom_call.1} parent=39 // pred_region
          %602 = vsyncadd %s594, 0
          %s603 = sadd.s32 %s26, %s25
          %s604 = smul.addr %s603, 8
          %s605 = scalar_lea.hbm %s5, %s604
          %s607 = sshll.u32 %s597, 4
          %s608 = int_to_ptr.vmem [resolvable:$true] %s607
          %s609 = sshll.u32 %s605, 4
          %s610 = int_to_ptr.hbm [resolvable:$true] %s609
          %612 = dma.vmem_to_hbm [thread:$0]  %s608, 128, %s610, %s594
        $region52: #{tpu_custom_call.1} parent=39 // pred_fallthru
          _
      $region40: #{tpu_custom_call.1} parent=5 // pred_fallthru
        _
      %p613 = scmp.le.s32.totalorder 2, %s16
      // Predicated region
      $region53: #{tpu_custom_call.1} parent=5 // pred_check
        %p614 = pneg %p613
      $region54: #{tpu_custom_call.1} parent=5 // pred_check_branch
        %616 = sbr.rel (%p614) target = $region56
      $region55: #{tpu_custom_call.1} parent=5 // pred_region
        %s617 = ssub.s32 %s16, 2
        // Predicated region
        $region57: #{tpu_custom_call.1} parent=55 // pred_check
          %p618 = pneg %p171
        $region58: #{tpu_custom_call.1} parent=55 // pred_check_branch
          %620 = sbr.rel (%p618) target = $region60
        $region59: #{tpu_custom_call.1} parent=55 // pred_region
          %s621 = sand.u32 %s156, 1
          %s622 = scalar_lea.sflag [#allocation5], %s621
          %s623 = sand.u32 %s156, 1
          %s624 = smul.addr %s623, 8
          %s625 = scalar_lea.vmem [#allocation8], %s624
          %627 = dma.done %s622, 128
        $region60: #{tpu_custom_call.1} parent=55 // pred_fallthru
          _
      $region56: #{tpu_custom_call.1} parent=5 // pred_fallthru
        _
    $region6: #{tpu_custom_call.1} parent=1 // loop_footer
      %s20 = sadd.s32 1, %s16
    $region7: #{tpu_custom_call.1} parent=1 // loop_footer_branch
      %15 = sbr.rel target = $region3
    $region8: #{tpu_custom_call.1} parent=1 // loop_exit
      _
    %628 = vsyncpa [#allocation4], 1
    %s629 = scalar_lea.sflag [#allocation4], 1
    %630 = vsyncpa %s629, 1
    %631 = vsyncpa [#allocation5], 1
    %s632 = scalar_lea.sflag [#allocation5], 1
    %633 = vsyncpa %s632, 1
    %634 = vsyncpa [#allocation6], 1
    %s635 = scalar_lea.sflag [#allocation6], 1
    %636 = vsyncpa %s635, 1

</llo_original>
